<compile_context>
chip_gen: v7x
topology: tpu7x:2x2x1
jax: 0.10.0
libtpu: 0.0.40
codegen_flags: <defaults>
</compile_context>

<pallas_src>
import functools

import jax
import jax.numpy as jnp
from jax.experimental import pallas as pl
from jax.experimental.pallas import tpu as pltpu

CNN_KERNEL_SIZE = 3
NUM_CHANNEL = 64


def conv1d_relu_kernel(x_ref, w_ref, b_ref, o_ref):
    """Valid Conv1d (in_channels=1) + bias + ReLU, NCW layout, exact width.

    x_ref: (N, 1, L)       f32 VMEM (native NCW input, no padding)
    w_ref: (C, K)          f32 VMEM (torch weight (C,1,K) squeezed)
    b_ref: (C, 1)          f32 VMEM
    o_ref: (N, C, L_out)   f32 VMEM, L_out = L - K + 1 (exact, masked tail store)
    """
    x = x_ref[...]                       # (N, 1, L): length on lanes
    w = w_ref[...]                       # (C, K)
    b = b_ref[...]                       # (C, 1)
    n, c, l_out = o_ref.shape
    k_size = w.shape[1]

    # Bias folded into the accumulator init (saves a full-slab VALU pass).
    acc = jnp.broadcast_to(b[None, :, :], (n, c, l_out))
    # K is a tiny static constant (3): unrolled shift-MAC on the VPU.
    #   x[:, :, k:k+l_out] : in-tile lane slice + sublane broadcast 1 -> C
    #   w[:, k][None,:,None]: lane splat of sublane-resident weights
    for k in range(k_size):
        acc = acc + x[:, :, k:k + l_out] * w[:, k][None, :, None]
    o_ref[...] = jnp.maximum(acc, 0.0).astype(o_ref.dtype)


@functools.partial(jax.jit)
def cnn_simple_forward(x_ncw, weight, bias):
    """x_ncw: (N, 1, L) f32 ; weight: (C, 1, K) f32 ; bias: (C,) f32
    returns (N, C, L_out) f32, matching PyTorch Conv1d + ReLU semantics."""
    n, cin, l = x_ncw.shape
    assert cin == 1
    c_out, _, k_size = weight.shape
    l_out = l - k_size + 1

    # Metadata-only reshapes (no HBM copies); x is passed through untouched.
    w_ck = weight.reshape(c_out, k_size).astype(jnp.float32)   # (C, K)
    b_c1 = bias.reshape(c_out, 1).astype(jnp.float32)          # (C, 1)

    vmem_spec = pl.BlockSpec(memory_space=pltpu.MemorySpace.VMEM)
    out = pl.pallas_call(
        conv1d_relu_kernel,
        out_shape=jax.ShapeDtypeStruct((n, c_out, l_out), jnp.float32),
        in_specs=[vmem_spec, vmem_spec, vmem_spec],
        out_specs=vmem_spec,
    )(x_ncw.astype(jnp.float32), w_ck, b_c1)

    return out                                                 # (N, C, L_out)


def _reference(x_ncw, weight, bias):
    """Pure-JAX reference of Conv1d(1->C, k, stride=1, valid) + ReLU."""
    n, _, l = x_ncw.shape
    c_out, _, k_size = weight.shape
    l_out = l - k_size + 1
    x = x_ncw[:, 0, :]                                         # (N, L)
    out = jnp.zeros((n, c_out, l_out), jnp.float32)
    for k in range(k_size):
        out = out + x[:, None, k:k + l_out] * weight[:, 0, k][None, :, None]
    out = out + bias[None, :, None]
    return jnp.maximum(out, 0.0)


if __name__ == "__main__":
    # Small shapes consistent with the module: num_in_var=94 (default),
    # in_channels=1, out_channels=64, kernel_size=3, stride=1, batch=2.
    N, L = 2, 94
    key = jax.random.PRNGKey(0)
    kx, kw, kb = jax.random.split(key, 3)

    x = jax.random.normal(kx, (N, 1, L), dtype=jnp.float32)
    # Deterministic synthetic parameters (torch Conv1d weight shape (C_out, C_in, K)).
    fan_in = 1 * CNN_KERNEL_SIZE
    bound = 1.0 / (fan_in ** 0.5)
    weight = jax.random.uniform(kw, (NUM_CHANNEL, 1, CNN_KERNEL_SIZE),
                                minval=-bound, maxval=bound, dtype=jnp.float32)
    bias = jax.random.uniform(kb, (NUM_CHANNEL,),
                              minval=-bound, maxval=bound, dtype=jnp.float32)

    out = cnn_simple_forward(x, weight, bias)
    out = jax.block_until_ready(out)

    ref = _reference(x, weight, bias)
    assert out.shape == (N, NUM_CHANNEL, L - CNN_KERNEL_SIZE + 1), out.shape
    assert jnp.allclose(out, ref, atol=1e-5, rtol=1e-5), "mismatch vs reference"

    print("KERNEL_OK")
</pallas_src>

<mosaic_0001>
module attributes {stable_mosaic.version = 11 : i64} {
  func.func @conv1d_relu_kernel(%arg0: memref<2x1x94xf32, #tpu.memory_space<vmem>>, %arg1: memref<64x3xf32, #tpu.memory_space<vmem>>, %arg2: memref<64x1xf32, #tpu.memory_space<vmem>>, %arg3: memref<2x64x92xf32, #tpu.memory_space<vmem>>) attributes {dimension_semantics = [], scalar_prefetch = 0 : i64, scratch_operands = 0 : i64, tpu.core_type = #tpu.core_type<tc>} {
    %c0 = arith.constant 0 : index
    %c0_0 = arith.constant 0 : index
    %c0_1 = arith.constant 0 : index
    %0 = vector.load %arg0[%c0, %c0_0, %c0_1] : memref<2x1x94xf32, #tpu.memory_space<vmem>>, vector<2x1x94xf32>
    %c0_2 = arith.constant 0 : index
    %c0_3 = arith.constant 0 : index
    %1 = vector.load %arg1[%c0_2, %c0_3] : memref<64x3xf32, #tpu.memory_space<vmem>>, vector<64x3xf32>
    %c0_4 = arith.constant 0 : index
    %c0_5 = arith.constant 0 : index
    %2 = vector.load %arg2[%c0_4, %c0_5] : memref<64x1xf32, #tpu.memory_space<vmem>>, vector<64x1xf32>
    %3 = vector.shape_cast %2 : vector<64x1xf32> to vector<1x64x1xf32>
    %4 = vector.shape_cast %3 : vector<1x64x1xf32> to vector<1x64x1xf32>
    %5 = vector.broadcast %4 : vector<1x64x1xf32> to vector<2x64x92xf32>
    %6 = vector.extract_strided_slice %0 {offsets = [0, 0, 0], sizes = [2, 1, 92], strides = [1, 1, 1]} : vector<2x1x94xf32> to vector<2x1x92xf32>
    %7 = vector.extract_strided_slice %1 {offsets = [0, 0], sizes = [64, 1], strides = [1, 1]} : vector<64x3xf32> to vector<64x1xf32>
    %8 = vector.shape_cast %7 : vector<64x1xf32> to vector<64xf32>
    %9 = vector.shape_cast %8 : vector<64xf32> to vector<1x64x1xf32>
    %10 = vector.broadcast %6 : vector<2x1x92xf32> to vector<2x64x92xf32>
    %11 = vector.broadcast %9 : vector<1x64x1xf32> to vector<2x64x92xf32>
    %12 = arith.mulf %10, %11 : vector<2x64x92xf32>
    %13 = arith.addf %5, %12 : vector<2x64x92xf32>
    %14 = vector.extract_strided_slice %0 {offsets = [0, 0, 1], sizes = [2, 1, 92], strides = [1, 1, 1]} : vector<2x1x94xf32> to vector<2x1x92xf32>
    %15 = vector.extract_strided_slice %1 {offsets = [0, 1], sizes = [64, 1], strides = [1, 1]} : vector<64x3xf32> to vector<64x1xf32>
    %16 = vector.shape_cast %15 : vector<64x1xf32> to vector<64xf32>
    %17 = vector.shape_cast %16 : vector<64xf32> to vector<1x64x1xf32>
    %18 = vector.broadcast %14 : vector<2x1x92xf32> to vector<2x64x92xf32>
    %19 = vector.broadcast %17 : vector<1x64x1xf32> to vector<2x64x92xf32>
    %20 = arith.mulf %18, %19 : vector<2x64x92xf32>
    %21 = arith.addf %13, %20 : vector<2x64x92xf32>
    %22 = vector.extract_strided_slice %0 {offsets = [0, 0, 2], sizes = [2, 1, 92], strides = [1, 1, 1]} : vector<2x1x94xf32> to vector<2x1x92xf32>
    %23 = vector.extract_strided_slice %1 {offsets = [0, 2], sizes = [64, 1], strides = [1, 1]} : vector<64x3xf32> to vector<64x1xf32>
    %24 = vector.shape_cast %23 : vector<64x1xf32> to vector<64xf32>
    %25 = vector.shape_cast %24 : vector<64xf32> to vector<1x64x1xf32>
    %26 = vector.broadcast %22 : vector<2x1x92xf32> to vector<2x64x92xf32>
    %27 = vector.broadcast %25 : vector<1x64x1xf32> to vector<2x64x92xf32>
    %28 = arith.mulf %26, %27 : vector<2x64x92xf32>
    %29 = arith.addf %21, %28 : vector<2x64x92xf32>
    %cst = arith.constant 0.000000e+00 : f32
    %30 = vector.broadcast %cst : f32 to vector<2x64x92xf32>
    %31 = arith.maximumf %29, %30 : vector<2x64x92xf32>
    %c0_6 = arith.constant 0 : index
    %c0_7 = arith.constant 0 : index
    %c0_8 = arith.constant 0 : index
    %32 = vector.load %arg3[%c0_6, %c0_7, %c0_8] : memref<2x64x92xf32, #tpu.memory_space<vmem>>, vector<2x64x92xf32>
    tpu.vector_store %arg3[%c0_6, %c0_7, %c0_8], %31 {strides = array<i32>} : memref<2x64x92xf32, #tpu.memory_space<vmem>>, vector<2x64x92xf32>,
    return
  }
}

</mosaic_0001>

<llo_original>
// kernel: cnn_simple_forward.1
$region0: #{cnn_simple_forward.1}
  #allocation0 [shape = 'u32[]', space=smem, size = 0x4, offset = 0x4, fixed_abs, tag = 'smem constant byte address 0x4 - core index']
  #allocation1 [shape = 'u32[144,128]{1,0:T(1,128)}', space=vmem, size = 0x12000, scoped, tag = 'internal scratch']
  %s0 = inlined_call_operand.vmem [shape: f32[2,1,94], index: 0, kind: input, shape index: {}]
  %s1 = inlined_call_operand.vmem [shape: f32[64,3], index: 1, kind: input, shape index: {}]
  %s2 = inlined_call_operand.vmem [shape: f32[64,1], index: 2, kind: input, shape index: {}]
  %s3 = inlined_call_operand.hbm [shape: f32[2,64,92], index: 3, kind: output, shape index: {}]
  %s4 = sld [smem:[#allocation0]]
  $region22: #{cnn_simple_forward.1} parent=0
    _
  %s6 = ssub.s32 1, %s4
  %s7 = scalar_select 0, %s6, %s4
  $region1: #{cnn_simple_forward.1} parent=0
    #allocation2 [shape = 'u8[65536]{0}', space=vmem, size = 0x10000, scoped, tag = 'output window, operand 0, single buffered']
    #allocation3 [shape = 's32[1]{0}', space=sflag, size = 0x4, scoped, tag = 'scoped memory for cnn_simple_forward.1']
    %8 = vsyncpa [#allocation3], 0
    // Predicated region
    $region2: #{cnn_simple_forward.1} parent=1 // pred_check
      _
    $region3: #{cnn_simple_forward.1} parent=1 // pred_check_branch
      %10 = sbr.rel (0) target = $region5
    $region4: #{cnn_simple_forward.1} parent=1 // pred_region
      _
    $region5: #{cnn_simple_forward.1} parent=1 // pred_fallthru
      _
    // Predicated region
    $region6: #{cnn_simple_forward.1} parent=1 // pred_check
      _
    $region7: #{cnn_simple_forward.1} parent=1 // pred_check_branch
      %12 = sbr.rel (0) target = $region9
    $region8: #{cnn_simple_forward.1} parent=1 // pred_region
      _
    $region9: #{cnn_simple_forward.1} parent=1 // pred_fallthru
      _
    // Predicated region
    $region10: #{cnn_simple_forward.1} parent=1 // pred_check
      _
    $region11: #{cnn_simple_forward.1} parent=1 // pred_check_branch
      %14 = sbr.rel (0) target = $region13
    $region12: #{cnn_simple_forward.1} parent=1 // pred_region
      _
    $region13: #{cnn_simple_forward.1} parent=1 // pred_fallthru
      _
    %v15 = vld [vmem:[%s0] sm:$0x1]
    %v16 = vld [vmem:[%s0 + $0x1] sm:$0x1]
    %v17 = vld [vmem:[%s1] sm:$0xff]
    %v18 = vld [vmem:[%s1 + $0x8] sm:$0xff]
    %v19 = vld [vmem:[%s1 + $0x10] sm:$0xff]
    %v20 = vld [vmem:[%s1 + $0x18] sm:$0xff]
    %v21 = vld [vmem:[%s1 + $0x20] sm:$0xff]
    %v22 = vld [vmem:[%s1 + $0x28] sm:$0xff]
    %v23 = vld [vmem:[%s1 + $0x30] sm:$0xff]
    %v24 = vld [vmem:[%s1 + $0x38] sm:$0xff]
    %v25 = vld [vmem:[%s2] sm:$0xff]
    %v26 = vld [vmem:[%s2 + $0x8] sm:$0xff]
    %v27 = vld [vmem:[%s2 + $0x10] sm:$0xff]
    %v28 = vld [vmem:[%s2 + $0x18] sm:$0xff]
    %v29 = vld [vmem:[%s2 + $0x20] sm:$0xff]
    %v30 = vld [vmem:[%s2 + $0x28] sm:$0xff]
    %v31 = vld [vmem:[%s2 + $0x30] sm:$0xff]
    %v32 = vld [vmem:[%s2 + $0x38] sm:$0xff]
    %34 = vset.pattern.permute.xlu0 0
    %35 = vperm.xlu0 %34, %v25
    %v36 = vpop.permute.xlu0 %35
    %39 = vset.pattern.permute.xlu0 0
    %40 = vperm.xlu0 %39, %v26
    %v41 = vpop.permute.xlu0 %40
    %44 = vset.pattern.permute.xlu0 0
    %45 = vperm.xlu0 %44, %v27
    %v46 = vpop.permute.xlu0 %45
    %49 = vset.pattern.permute.xlu0 0
    %50 = vperm.xlu0 %49, %v28
    %v51 = vpop.permute.xlu0 %50
    %54 = vset.pattern.permute.xlu0 0
    %55 = vperm.xlu0 %54, %v29
    %v56 = vpop.permute.xlu0 %55
    %59 = vset.pattern.permute.xlu0 0
    %60 = vperm.xlu0 %59, %v30
    %v61 = vpop.permute.xlu0 %60
    %64 = vset.pattern.permute.xlu0 0
    %65 = vperm.xlu0 %64, %v31
    %v66 = vpop.permute.xlu0 %65
    %69 = vset.pattern.permute.xlu0 0
    %70 = vperm.xlu0 %69, %v32
    %v71 = vpop.permute.xlu0 %70
    %v75 = vlaneseq
    %v76 = vshrl.u32 %v75, 7
    %v77 = vsub.s32 0, %v76
    %v78 = vrot.slane %v15, %v77
    %v79 = vlaneseq
    %v80 = vshrl.u32 %v79, 7
    %v81 = vsub.s32 0, %v80
    %v82 = vrot.slane %v16, %v81
    %86 = vset.pattern.permute.xlu0 0
    %87 = vperm.xlu0 %86, %v17
    %v88 = vpop.permute.xlu0 %87
    %91 = vset.pattern.permute.xlu0 0
    %92 = vperm.xlu0 %91, %v18
    %v93 = vpop.permute.xlu0 %92
    %96 = vset.pattern.permute.xlu0 0
    %97 = vperm.xlu0 %96, %v19
    %v98 = vpop.permute.xlu0 %97
    %101 = vset.pattern.permute.xlu0 0
    %102 = vperm.xlu0 %101, %v20
    %v103 = vpop.permute.xlu0 %102
    %106 = vset.pattern.permute.xlu0 0
    %107 = vperm.xlu0 %106, %v21
    %v108 = vpop.permute.xlu0 %107
    %111 = vset.pattern.permute.xlu0 0
    %112 = vperm.xlu0 %111, %v22
    %v113 = vpop.permute.xlu0 %112
    %116 = vset.pattern.permute.xlu0 0
    %117 = vperm.xlu0 %116, %v23
    %v118 = vpop.permute.xlu0 %117
    %121 = vset.pattern.permute.xlu0 0
    %122 = vperm.xlu0 %121, %v24
    %v123 = vpop.permute.xlu0 %122
    %v125 = vmul.f32 %v78, %v88
    %v126 = vmul.f32 %v78, %v93
    %v127 = vmul.f32 %v78, %v98
    %v128 = vmul.f32 %v78, %v103
    %v129 = vmul.f32 %v78, %v108
    %v130 = vmul.f32 %v78, %v113
    %v131 = vmul.f32 %v78, %v118
    %v132 = vmul.f32 %v78, %v123
    %v133 = vmul.f32 %v82, %v88
    %v134 = vmul.f32 %v82, %v93
    %v135 = vmul.f32 %v82, %v98
    %v136 = vmul.f32 %v82, %v103
    %v137 = vmul.f32 %v82, %v108
    %v138 = vmul.f32 %v82, %v113
    %v139 = vmul.f32 %v82, %v118
    %v140 = vmul.f32 %v82, %v123
    %v141 = vadd.f32 %v36, %v125
    %v142 = vadd.f32 %v41, %v126
    %v143 = vadd.f32 %v46, %v127
    %v144 = vadd.f32 %v51, %v128
    %v145 = vadd.f32 %v56, %v129
    %v146 = vadd.f32 %v61, %v130
    %v147 = vadd.f32 %v66, %v131
    %v148 = vadd.f32 %v71, %v132
    %v149 = vadd.f32 %v36, %v133
    %v150 = vadd.f32 %v41, %v134
    %v151 = vadd.f32 %v46, %v135
    %v152 = vadd.f32 %v51, %v136
    %v153 = vadd.f32 %v56, %v137
    %v154 = vadd.f32 %v61, %v138
    %v155 = vadd.f32 %v66, %v139
    %v156 = vadd.f32 %v71, %v140
    %157 = vset.pattern.permute.xlu0 1
    %158 = vperm.xlu0 %157, %v17
    %v159 = vpop.permute.xlu0 %158
    %161 = vset.pattern.permute.xlu0 1
    %162 = vperm.xlu0 %161, %v18
    %v163 = vpop.permute.xlu0 %162
    %165 = vset.pattern.permute.xlu0 1
    %166 = vperm.xlu0 %165, %v19
    %v167 = vpop.permute.xlu0 %166
    %169 = vset.pattern.permute.xlu0 1
    %170 = vperm.xlu0 %169, %v20
    %v171 = vpop.permute.xlu0 %170
    %173 = vset.pattern.permute.xlu0 1
    %174 = vperm.xlu0 %173, %v21
    %v175 = vpop.permute.xlu0 %174
    %177 = vset.pattern.permute.xlu0 1
    %178 = vperm.xlu0 %177, %v22
    %v179 = vpop.permute.xlu0 %178
    %181 = vset.pattern.permute.xlu0 1
    %182 = vperm.xlu0 %181, %v23
    %v183 = vpop.permute.xlu0 %182
    %185 = vset.pattern.permute.xlu0 1
    %186 = vperm.xlu0 %185, %v24
    %v187 = vpop.permute.xlu0 %186
    %v189 = vmul.f32 %v78, %v159
    %v190 = vmul.f32 %v78, %v163
    %v191 = vmul.f32 %v78, %v167
    %v192 = vmul.f32 %v78, %v171
    %v193 = vmul.f32 %v78, %v175
    %v194 = vmul.f32 %v78, %v179
    %v195 = vmul.f32 %v78, %v183
    %v196 = vmul.f32 %v78, %v187
    %v197 = vmul.f32 %v82, %v159
    %v198 = vmul.f32 %v82, %v163
    %v199 = vmul.f32 %v82, %v167
    %v200 = vmul.f32 %v82, %v171
    %v201 = vmul.f32 %v82, %v175
    %v202 = vmul.f32 %v82, %v179
    %v203 = vmul.f32 %v82, %v183
    %v204 = vmul.f32 %v82, %v187
    %221 = vrot.lane.b32.xlu0 %v189, 127
    %v222 = vpop.permute.xlu0 %221
    %223 = vrot.lane.b32.xlu0 %v190, 127
    %v224 = vpop.permute.xlu0 %223
    %225 = vrot.lane.b32.xlu0 %v191, 127
    %v226 = vpop.permute.xlu0 %225
    %227 = vrot.lane.b32.xlu0 %v192, 127
    %v228 = vpop.permute.xlu0 %227
    %229 = vrot.lane.b32.xlu0 %v193, 127
    %v230 = vpop.permute.xlu0 %229
    %231 = vrot.lane.b32.xlu0 %v194, 127
    %v232 = vpop.permute.xlu0 %231
    %233 = vrot.lane.b32.xlu0 %v195, 127
    %v234 = vpop.permute.xlu0 %233
    %235 = vrot.lane.b32.xlu0 %v196, 127
    %v236 = vpop.permute.xlu0 %235
    %237 = vrot.lane.b32.xlu0 %v197, 127
    %v238 = vpop.permute.xlu0 %237
    %239 = vrot.lane.b32.xlu0 %v198, 127
    %v240 = vpop.permute.xlu0 %239
    %241 = vrot.lane.b32.xlu0 %v199, 127
    %v242 = vpop.permute.xlu0 %241
    %243 = vrot.lane.b32.xlu0 %v200, 127
    %v244 = vpop.permute.xlu0 %243
    %245 = vrot.lane.b32.xlu0 %v201, 127
    %v246 = vpop.permute.xlu0 %245
    %247 = vrot.lane.b32.xlu0 %v202, 127
    %v248 = vpop.permute.xlu0 %247
    %249 = vrot.lane.b32.xlu0 %v203, 127
    %v250 = vpop.permute.xlu0 %249
    %251 = vrot.lane.b32.xlu0 %v204, 127
    %v252 = vpop.permute.xlu0 %251
    %v269 = vadd.f32 %v141, %v222
    %v270 = vadd.f32 %v142, %v224
    %v271 = vadd.f32 %v143, %v226
    %v272 = vadd.f32 %v144, %v228
    %v273 = vadd.f32 %v145, %v230
    %v274 = vadd.f32 %v146, %v232
    %v275 = vadd.f32 %v147, %v234
    %v276 = vadd.f32 %v148, %v236
    %v277 = vadd.f32 %v149, %v238
    %v278 = vadd.f32 %v150, %v240
    %v279 = vadd.f32 %v151, %v242
    %v280 = vadd.f32 %v152, %v244
    %v281 = vadd.f32 %v153, %v246
    %v282 = vadd.f32 %v154, %v248
    %v283 = vadd.f32 %v155, %v250
    %v284 = vadd.f32 %v156, %v252
    %285 = vset.pattern.permute.xlu0 2
    %286 = vperm.xlu0 %285, %v17
    %v287 = vpop.permute.xlu0 %286
    %289 = vset.pattern.permute.xlu0 2
    %290 = vperm.xlu0 %289, %v18
    %v291 = vpop.permute.xlu0 %290
    %293 = vset.pattern.permute.xlu0 2
    %294 = vperm.xlu0 %293, %v19
    %v295 = vpop.permute.xlu0 %294
    %297 = vset.pattern.permute.xlu0 2
    %298 = vperm.xlu0 %297, %v20
    %v299 = vpop.permute.xlu0 %298
    %301 = vset.pattern.permute.xlu0 2
    %302 = vperm.xlu0 %301, %v21
    %v303 = vpop.permute.xlu0 %302
    %305 = vset.pattern.permute.xlu0 2
    %306 = vperm.xlu0 %305, %v22
    %v307 = vpop.permute.xlu0 %306
    %309 = vset.pattern.permute.xlu0 2
    %310 = vperm.xlu0 %309, %v23
    %v311 = vpop.permute.xlu0 %310
    %313 = vset.pattern.permute.xlu0 2
    %314 = vperm.xlu0 %313, %v24
    %v315 = vpop.permute.xlu0 %314
    %v317 = vmul.f32 %v78, %v287
    %v318 = vmul.f32 %v78, %v291
    %v319 = vmul.f32 %v78, %v295
    %v320 = vmul.f32 %v78, %v299
    %v321 = vmul.f32 %v78, %v303
    %v322 = vmul.f32 %v78, %v307
    %v323 = vmul.f32 %v78, %v311
    %v324 = vmul.f32 %v78, %v315
    %v325 = vmul.f32 %v82, %v287
    %v326 = vmul.f32 %v82, %v291
    %v327 = vmul.f32 %v82, %v295
    %v328 = vmul.f32 %v82, %v299
    %v329 = vmul.f32 %v82, %v303
    %v330 = vmul.f32 %v82, %v307
    %v331 = vmul.f32 %v82, %v311
    %v332 = vmul.f32 %v82, %v315
    %349 = vrot.lane.b32.xlu0 %v317, 126
    %v350 = vpop.permute.xlu0 %349
    %351 = vrot.lane.b32.xlu0 %v318, 126
    %v352 = vpop.permute.xlu0 %351
    %353 = vrot.lane.b32.xlu0 %v319, 126
    %v354 = vpop.permute.xlu0 %353
    %355 = vrot.lane.b32.xlu0 %v320, 126
    %v356 = vpop.permute.xlu0 %355
    %357 = vrot.lane.b32.xlu0 %v321, 126
    %v358 = vpop.permute.xlu0 %357
    %359 = vrot.lane.b32.xlu0 %v322, 126
    %v360 = vpop.permute.xlu0 %359
    %361 = vrot.lane.b32.xlu0 %v323, 126
    %v362 = vpop.permute.xlu0 %361
    %363 = vrot.lane.b32.xlu0 %v324, 126
    %v364 = vpop.permute.xlu0 %363
    %365 = vrot.lane.b32.xlu0 %v325, 126
    %v366 = vpop.permute.xlu0 %365
    %367 = vrot.lane.b32.xlu0 %v326, 126
    %v368 = vpop.permute.xlu0 %367
    %369 = vrot.lane.b32.xlu0 %v327, 126
    %v370 = vpop.permute.xlu0 %369
    %371 = vrot.lane.b32.xlu0 %v328, 126
    %v372 = vpop.permute.xlu0 %371
    %373 = vrot.lane.b32.xlu0 %v329, 126
    %v374 = vpop.permute.xlu0 %373
    %375 = vrot.lane.b32.xlu0 %v330, 126
    %v376 = vpop.permute.xlu0 %375
    %377 = vrot.lane.b32.xlu0 %v331, 126
    %v378 = vpop.permute.xlu0 %377
    %379 = vrot.lane.b32.xlu0 %v332, 126
    %v380 = vpop.permute.xlu0 %379
    %v397 = vadd.f32 %v269, %v350
    %v398 = vadd.f32 %v270, %v352
    %v399 = vadd.f32 %v271, %v354
    %v400 = vadd.f32 %v272, %v356
    %v401 = vadd.f32 %v273, %v358
    %v402 = vadd.f32 %v274, %v360
    %v403 = vadd.f32 %v275, %v362
    %v404 = vadd.f32 %v276, %v364
    %v405 = vadd.f32 %v277, %v366
    %v406 = vadd.f32 %v278, %v368
    %v407 = vadd.f32 %v279, %v370
    %v408 = vadd.f32 %v280, %v372
    %v409 = vadd.f32 %v281, %v374
    %v410 = vadd.f32 %v282, %v376
    %v411 = vadd.f32 %v283, %v378
    %v412 = vadd.f32 %v284, %v380
    %v413 = vmax.f32 %v397, 0.0
    %v414 = vmax.f32 %v398, 0.0
    %v415 = vmax.f32 %v399, 0.0
    %v416 = vmax.f32 %v400, 0.0
    %v417 = vmax.f32 %v401, 0.0
    %v418 = vmax.f32 %v402, 0.0
    %v419 = vmax.f32 %v403, 0.0
    %v420 = vmax.f32 %v404, 0.0
    %v421 = vmax.f32 %v405, 0.0
    %v422 = vmax.f32 %v406, 0.0
    %v423 = vmax.f32 %v407, 0.0
    %v424 = vmax.f32 %v408, 0.0
    %v425 = vmax.f32 %v409, 0.0
    %v426 = vmax.f32 %v410, 0.0
    %v427 = vmax.f32 %v411, 0.0
    %v428 = vmax.f32 %v412, 0.0
    %vm429 = vcmask 752640
    %430 = vst.msk [vmem:[#allocation2] sm:$0xff] %vm429, %v413
    %431 = vst.msk [vmem:[#allocation2 + $0x8] sm:$0xff] %vm429, %v414
    %432 = vst.msk [vmem:[#allocation2 + $0x10] sm:$0xff] %vm429, %v415
    %433 = vst.msk [vmem:[#allocation2 + $0x18] sm:$0xff] %vm429, %v416
    %434 = vst.msk [vmem:[#allocation2 + $0x20] sm:$0xff] %vm429, %v417
    %435 = vst.msk [vmem:[#allocation2 + $0x28] sm:$0xff] %vm429, %v418
    %436 = vst.msk [vmem:[#allocation2 + $0x30] sm:$0xff] %vm429, %v419
    %437 = vst.msk [vmem:[#allocation2 + $0x38] sm:$0xff] %vm429, %v420
    %438 = vst.msk [vmem:[#allocation2 + $0x40] sm:$0xff] %vm429, %v421
    %439 = vst.msk [vmem:[#allocation2 + $0x48] sm:$0xff] %vm429, %v422
    %440 = vst.msk [vmem:[#allocation2 + $0x50] sm:$0xff] %vm429, %v423
    %441 = vst.msk [vmem:[#allocation2 + $0x58] sm:$0xff] %vm429, %v424
    %442 = vst.msk [vmem:[#allocation2 + $0x60] sm:$0xff] %vm429, %v425
    %443 = vst.msk [vmem:[#allocation2 + $0x68] sm:$0xff] %vm429, %v426
    %444 = vst.msk [vmem:[#allocation2 + $0x70] sm:$0xff] %vm429, %v427
    %445 = vst.msk [vmem:[#allocation2 + $0x78] sm:$0xff] %vm429, %v428
    // Predicated region
    $region14: #{cnn_simple_forward.1} parent=1 // pred_check
      _
    $region15: #{cnn_simple_forward.1} parent=1 // pred_check_branch
      %447 = sbr.rel (0) target = $region17
    $region16: #{cnn_simple_forward.1} parent=1 // pred_region
      %s449 = ssub.s32 2048, 2048
      %450 = vsyncadd [#allocation3], %s449
      %s451 = sshll.u32 [#allocation2], 4
      %s452 = int_to_ptr.vmem [resolvable:$true] %s451
      %457 = dma.vmem_to_hbm [thread:$0]  %s452, 2048, %s3, [#allocation3], 128, 128, 8
    $region17: #{cnn_simple_forward.1} parent=1 // pred_fallthru
      _
    // Predicated region
    $region18: #{cnn_simple_forward.1} parent=1 // pred_check
      _
    $region19: #{cnn_simple_forward.1} parent=1 // pred_check_branch
      %459 = sbr.rel (0) target = $region21
    $region20: #{cnn_simple_forward.1} parent=1 // pred_region
      %460 = dma.done [#allocation3], 2048
    $region21: #{cnn_simple_forward.1} parent=1 // pred_fallthru
      _
    %461 = vsyncpa [#allocation3], 1

</llo_original>
